<compile_context>
chip_gen: v6e
topology: v6e:2x2x1
jax: 0.10.0
libtpu: 0.0.40
codegen_flags: <defaults>
</compile_context>

<pallas_src>
import jax
import jax.numpy as jnp
from jax.experimental import pallas as pl
from jax.experimental.pallas import tpu as pltpu

LANE = 128  # pad feature / hidden / class dims to full 128-lane vregs


# ----------------------------- Pallas kernel ---------------------------------

def make_fused_kernel(num_graphs):
    def kernel(a_ref, x_ref, batch_ref, w_ref, b_ref, wlt_ref, blt_ref,
               o_ref, h_ref):
        layer = pl.program_id(0)

        # Layer 0: load the (lane-padded) node features into the resident activation buffer.
        @pl.when(layer == 0)
        def _():
            h_ref[...] = x_ref[...]

        # One GCN layer fused with ELU:  h = ELU( A_norm @ (h @ W_l) + b_l )
        xw = jnp.dot(h_ref[...], w_ref[...], preferred_element_type=jnp.float32)
        h = jnp.dot(a_ref[...], xw, preferred_element_type=jnp.float32) + b_ref[...]
        # ELU (alpha=1); exp branch only selected for h <= 0 (exp runs in the free EUP slot).
        h = jnp.where(h > 0.0, h, jnp.exp(h) - 1.0)
        # F.dropout is the identity at inference.
        # TODO(synk): training-mode dropout would use pltpu.prng_seed/prng_random_bits here.
        h_ref[...] = h

        # Last layer: global_max_pool + Linear(hidden, num_classes) + softmax, fused.
        @pl.when(layer == pl.num_programs(0) - 1)
        def _():
            neg = jnp.float32(-1e30)
            # graph id per node, broadcast ONCE to the activation shape (hoisted out of loop)
            bfull = jnp.broadcast_to(batch_ref[...], h.shape)          # (N, LANE)
            rows = []
            for g in range(num_graphs):                                # static unroll (G small)
                masked = jnp.where(bfull == jnp.float32(g), h, neg)
                rows.append(jnp.max(masked, axis=0, keepdims=True))    # (1, LANE)
            pooled = jnp.concatenate(rows, axis=0)                     # (G, LANE)
            logits = jnp.dot(pooled, wlt_ref[...],
                             preferred_element_type=jnp.float32) + blt_ref[...]
            m = jnp.max(logits, axis=1, keepdims=True)
            e = jnp.exp(logits - m)                                    # padded classes -> ~0
            o_ref[...] = e / jnp.sum(e, axis=1, keepdims=True)

    return kernel


# ------------------------------- Glue (JAX) -----------------------------------

def gcn_normalized_adjacency(edge_index, num_nodes):
    """D^{-1/2} (A + I) D^{-1/2}, messages flowing source -> target (PyG GCNConv)."""
    src, dst = edge_index[0], edge_index[1]
    adj = jnp.zeros((num_nodes, num_nodes), jnp.float32)
    adj = adj.at[dst, src].add(1.0)
    adj = adj + jnp.eye(num_nodes, dtype=jnp.float32)
    deg = adj.sum(axis=1)
    dinv = jnp.where(deg > 0, 1.0 / jnp.sqrt(deg), 0.0)
    return dinv[:, None] * adj * dinv[None, :]


def classify_graph_gc_forward(params, lt_params, x, edge_index, batch, num_graphs):
    num_nodes, num_features = x.shape
    num_layers = len(params)
    hidden = params[0][0].shape[1]
    w_lt, b_lt = lt_params
    num_classes = w_lt.shape[1]

    a_norm = gcn_normalized_adjacency(edge_index, num_nodes)

    # ---- zero-pad all feature-like dims to 128 lanes (keeps the math exact) ----
    x_pad = jnp.zeros((num_nodes, LANE), jnp.float32).at[:, :num_features].set(x)
    w_stack = jnp.zeros((num_layers, LANE, LANE), jnp.float32)
    b_stack = jnp.zeros((num_layers, 1, LANE), jnp.float32)
    for l, (w, b) in enumerate(params):
        fin, fout = w.shape
        w_stack = w_stack.at[l, :fin, :fout].set(w)
        b_stack = b_stack.at[l, 0, :fout].set(b)
    wlt_pad = jnp.zeros((LANE, LANE), jnp.float32).at[:hidden, :num_classes].set(w_lt)
    # padded class columns get a huge negative bias -> ~0 probability after softmax
    blt_pad = jnp.full((1, LANE), -1e30, jnp.float32).at[0, :num_classes].set(b_lt)
    batch_col = batch.astype(jnp.float32)[:, None]                      # (N, 1)

    grid_spec = pltpu.PrefetchScalarGridSpec(
        num_scalar_prefetch=0,
        grid=(num_layers,),
        in_specs=[
            pl.BlockSpec((num_nodes, num_nodes), lambda l: (0, 0)),     # A_norm (VMEM resident)
            pl.BlockSpec((num_nodes, LANE), lambda l: (0, 0)),          # x (resident)
            pl.BlockSpec((num_nodes, 1), lambda l: (0, 0)),             # graph id per node
            pl.BlockSpec((None, LANE, LANE), lambda l: (l, 0, 0)),      # W_l streamed per layer
            pl.BlockSpec((None, 1, LANE), lambda l: (l, 0, 0)),         # b_l streamed per layer
            pl.BlockSpec((LANE, LANE), lambda l: (0, 0)),               # W_lt
            pl.BlockSpec((1, LANE), lambda l: (0, 0)),                  # b_lt
        ],
        out_specs=pl.BlockSpec((num_graphs, LANE), lambda l: (0, 0)),
        scratch_shapes=[pltpu.VMEM((num_nodes, LANE), jnp.float32)],    # resident activations
    )

    out_pad = pl.pallas_call(
        make_fused_kernel(num_graphs),
        out_shape=jax.ShapeDtypeStruct((num_graphs, LANE), jnp.float32),
        grid_spec=grid_spec,
        compiler_params=pltpu.CompilerParams(
            dimension_semantics=("arbitrary",)),   # layers are a sequential dependency
    )(a_norm, x_pad, batch_col, w_stack, b_stack, wlt_pad, blt_pad)

    return out_pad[:, :num_classes]


def init_params(key, num_features, hidden, num_classes, num_layers):
    """Deterministic synthetic init matching the module's parameter shapes."""
    params = []
    dims = [num_features] + [hidden] * num_layers
    for i in range(num_layers):
        key, k1 = jax.random.split(key)
        w = jax.random.normal(k1, (dims[i], dims[i + 1]), jnp.float32) / jnp.sqrt(
            jnp.float32(dims[i]))
        b = jnp.zeros((dims[i + 1],), jnp.float32)
        params.append((w, b))
    key, k2 = jax.random.split(key)
    w_lt = jax.random.normal(k2, (hidden, num_classes), jnp.float32) / jnp.sqrt(
        jnp.float32(hidden))
    b_lt = jnp.zeros((num_classes,), jnp.float32)
    return params, (w_lt, b_lt)


# pure-JAX reference (unpadded, f32) for verification
def reference_forward(params, lt_params, x, edge_index, batch, num_graphs):
    n = x.shape[0]
    a_norm = gcn_normalized_adjacency(edge_index, n)
    h = x
    for (w, b) in params:
        h = a_norm @ (h @ w) + b[None, :]
        h = jnp.where(h > 0.0, h, jnp.exp(h) - 1.0)
    pooled = jnp.stack([
        jnp.max(jnp.where((batch == g)[:, None], h, -jnp.inf), axis=0)
        for g in range(num_graphs)], axis=0)
    w_lt, b_lt = lt_params
    logits = pooled @ w_lt + b_lt[None, :]
    return jax.nn.softmax(logits, axis=1)


# --------------------------------- Main ---------------------------------------

if __name__ == "__main__":
    num_features = 8      # args.num_features
    hidden = 32           # args.hidden
    num_classes = 3       # args.num_classes
    num_layers = 2        # args.num_layers1
    num_nodes = 16
    num_graphs = 2

    key = jax.random.PRNGKey(0)
    key, kx = jax.random.split(key)
    x = jax.random.normal(kx, (num_nodes, num_features), jnp.float32)

    # two chain graphs of 8 nodes each (bidirectional edges), deterministic
    srcs, dsts = [], []
    for g in range(num_graphs):
        base = g * 8
        for i in range(7):
            srcs += [base + i, base + i + 1]
            dsts += [base + i + 1, base + i]
    edge_index = jnp.array([srcs, dsts], dtype=jnp.int32)
    batch = jnp.array([0] * 8 + [1] * 8, dtype=jnp.int32)

    params, lt_params = init_params(key, num_features, hidden, num_classes, num_layers)

    out = classify_graph_gc_forward(params, lt_params, x, edge_index, batch, num_graphs)
    out = jax.block_until_ready(out)

    ref = reference_forward(params, lt_params, x, edge_index, batch, num_graphs)
    assert out.shape == (num_graphs, num_classes), out.shape
    assert jnp.allclose(out.sum(axis=1), 1.0, atol=1e-3), out
    assert jnp.allclose(out, ref, atol=1e-3, rtol=1e-3), (out, ref)

    print("KERNEL_OK")
</pallas_src>

<mosaic_0001>
module attributes {stable_mosaic.version = 11 : i64} {
  func.func @kernel(%arg0: i32, %arg1: memref<16x16xf32, #tpu.memory_space<vmem>>, %arg2: memref<16x128xf32, #tpu.memory_space<vmem>>, %arg3: memref<16x1xf32, #tpu.memory_space<vmem>>, %arg4: memref<1x128x128xf32, #tpu.memory_space<vmem>>, %arg5: memref<1x1x128xf32, #tpu.memory_space<vmem>>, %arg6: memref<128x128xf32, #tpu.memory_space<vmem>>, %arg7: memref<1x128xf32, #tpu.memory_space<vmem>>, %arg8: memref<2x128xf32, #tpu.memory_space<vmem>>, %arg9: memref<16x128xf32, #tpu.memory_space<vmem>>) attributes {dimension_semantics = [#tpu.dimension_semantics<arbitrary>], iteration_bounds = array<i64: 2>, scalar_prefetch = 0 : i64, scratch_operands = 1 : i64, tpu.core_type = #tpu.core_type<tc>, window_params = [{pipeline_mode = #tpu.pipeline_mode<synchronous>, transform_indices = @transform_0, window_bounds = array<i64: 16, 16>}, {pipeline_mode = #tpu.pipeline_mode<synchronous>, transform_indices = @transform_1, window_bounds = array<i64: 16, 128>}, {pipeline_mode = #tpu.pipeline_mode<synchronous>, transform_indices = @transform_2, window_bounds = array<i64: 16, 1>}, {transform_indices = @transform_3, window_bounds = array<i64: 1, 128, 128>}, {transform_indices = @transform_4, window_bounds = array<i64: 1, 1, 128>}, {pipeline_mode = #tpu.pipeline_mode<synchronous>, transform_indices = @transform_5, window_bounds = array<i64: 128, 128>}, {pipeline_mode = #tpu.pipeline_mode<synchronous>, transform_indices = @transform_6, window_bounds = array<i64: 1, 128>}, {pipeline_mode = #tpu.pipeline_mode<synchronous>, transform_indices = @transform_7, window_bounds = array<i64: 2, 128>}]} {
    %c0_i32 = arith.constant 0 : i32
    %0 = arith.cmpi eq, %arg0, %c0_i32 : i32
    %1 = arith.extui %0 : i1 to i32
    %c0_i32_0 = arith.constant 0 : i32
    %2 = arith.cmpi ne, %1, %c0_i32_0 : i32
    scf.if %2 {
      %c0_16 = arith.constant 0 : index
      %c0_17 = arith.constant 0 : index
      %23 = vector.load %arg2[%c0_16, %c0_17] : memref<16x128xf32, #tpu.memory_space<vmem>>, vector<16x128xf32>
      %c0_18 = arith.constant 0 : index
      %c0_19 = arith.constant 0 : index
      %24 = vector.load %arg9[%c0_18, %c0_19] : memref<16x128xf32, #tpu.memory_space<vmem>>, vector<16x128xf32>
      tpu.vector_store %arg9[%c0_18, %c0_19], %23 {strides = array<i32>} : memref<16x128xf32, #tpu.memory_space<vmem>>, vector<16x128xf32>,
    } else {
    }
    %c0 = arith.constant 0 : index
    %c0_1 = arith.constant 0 : index
    %3 = vector.load %arg9[%c0, %c0_1] : memref<16x128xf32, #tpu.memory_space<vmem>>, vector<16x128xf32>
    %c0_2 = arith.constant 0 : index
    %c0_3 = arith.constant 0 : index
    %c0_4 = arith.constant 0 : index
    %4 = vector.load %arg4[%c0_2, %c0_3, %c0_4] : memref<1x128x128xf32, #tpu.memory_space<vmem>>, vector<1x128x128xf32>
    %5 = vector.shape_cast %4 : vector<1x128x128xf32> to vector<128x128xf32>
    %cst = arith.constant dense<0.000000e+00> : vector<16x128xf32>
    %6 = tpu.matmul %3, %5, %cst {dimension_numbers = #tpu.dot_dimension_numbers<[1], [0], [0], [1], [0, 0, 1, 1], [], []>} : vector<16x128xf32>, vector<128x128xf32>, vector<16x128xf32> -> vector<16x128xf32>
    %c0_5 = arith.constant 0 : index
    %c0_6 = arith.constant 0 : index
    %7 = vector.load %arg1[%c0_5, %c0_6] : memref<16x16xf32, #tpu.memory_space<vmem>>, vector<16x16xf32>
    %cst_7 = arith.constant dense<0.000000e+00> : vector<16x128xf32>
    %8 = tpu.matmul %7, %6, %cst_7 {dimension_numbers = #tpu.dot_dimension_numbers<[1], [0], [0], [1], [0, 0, 1, 1], [], []>} : vector<16x16xf32>, vector<16x128xf32>, vector<16x128xf32> -> vector<16x128xf32>
    %c0_8 = arith.constant 0 : index
    %c0_9 = arith.constant 0 : index
    %c0_10 = arith.constant 0 : index
    %9 = vector.load %arg5[%c0_8, %c0_9, %c0_10] : memref<1x1x128xf32, #tpu.memory_space<vmem>>, vector<1x1x128xf32>
    %10 = vector.shape_cast %9 : vector<1x1x128xf32> to vector<1x128xf32>
    %11 = vector.broadcast %10 : vector<1x128xf32> to vector<16x128xf32>
    %12 = arith.addf %8, %11 : vector<16x128xf32>
    %cst_11 = arith.constant 0.000000e+00 : f32
    %13 = vector.broadcast %cst_11 : f32 to vector<16x128xf32>
    %14 = arith.cmpf ogt, %12, %13 : vector<16x128xf32>
    %15 = math.exp %12 : vector<16x128xf32>
    %cst_12 = arith.constant 1.000000e+00 : f32
    %16 = vector.broadcast %cst_12 : f32 to vector<16x128xf32>
    %17 = arith.subf %15, %16 : vector<16x128xf32>
    %18 = arith.select %14, %12, %17 : vector<16x128xi1>, vector<16x128xf32>
    %c0_13 = arith.constant 0 : index
    %c0_14 = arith.constant 0 : index
    %19 = vector.load %arg9[%c0_13, %c0_14] : memref<16x128xf32, #tpu.memory_space<vmem>>, vector<16x128xf32>
    tpu.vector_store %arg9[%c0_13, %c0_14], %18 {strides = array<i32>} : memref<16x128xf32, #tpu.memory_space<vmem>>, vector<16x128xf32>,
    %c1_i32 = arith.constant 1 : i32
    %20 = arith.cmpi eq, %arg0, %c1_i32 : i32
    %21 = arith.extui %20 : i1 to i32
    %c0_i32_15 = arith.constant 0 : i32
    %22 = arith.cmpi ne, %21, %c0_i32_15 : i32
    scf.if %22 {
      %c0_16 = arith.constant 0 : index
      %c0_17 = arith.constant 0 : index
      %23 = vector.load %arg3[%c0_16, %c0_17] : memref<16x1xf32, #tpu.memory_space<vmem>>, vector<16x1xf32>
      %24 = vector.shape_cast %23 : vector<16x1xf32> to vector<16x1xf32>
      %25 = vector.broadcast %24 : vector<16x1xf32> to vector<16x128xf32>
      %cst_18 = arith.constant 0.000000e+00 : f32
      %26 = vector.broadcast %cst_18 : f32 to vector<16x128xf32>
      %27 = arith.cmpf oeq, %25, %26 : vector<16x128xf32>
      %cst_19 = arith.constant -1.000000e+30 : f32
      %28 = vector.broadcast %cst_19 : f32 to vector<16x128xf32>
      %29 = arith.select %27, %18, %28 : vector<16x128xi1>, vector<16x128xf32>
      %cst_20 = arith.constant dense<0xFF800000> : vector<128xf32>
      %30 = vector.multi_reduction <maximumf>, %29, %cst_20 [0] : vector<16x128xf32> to vector<128xf32>
      %31 = vector.shape_cast %30 : vector<128xf32> to vector<1x128xf32>
      %cst_21 = arith.constant 1.000000e+00 : f32
      %32 = vector.broadcast %cst_21 : f32 to vector<16x128xf32>
      %33 = arith.cmpf oeq, %25, %32 : vector<16x128xf32>
      %cst_22 = arith.constant -1.000000e+30 : f32
      %34 = vector.broadcast %cst_22 : f32 to vector<16x128xf32>
      %35 = arith.select %33, %18, %34 : vector<16x128xi1>, vector<16x128xf32>
      %cst_23 = arith.constant dense<0xFF800000> : vector<128xf32>
      %36 = vector.multi_reduction <maximumf>, %35, %cst_23 [0] : vector<16x128xf32> to vector<128xf32>
      %37 = vector.shape_cast %36 : vector<128xf32> to vector<1x128xf32>
      %38 = tpu.concatenate %31, %37 in 0 : vector<1x128xf32>, vector<1x128xf32> -> vector<2x128xf32>
      %c0_24 = arith.constant 0 : index
      %c0_25 = arith.constant 0 : index
      %39 = vector.load %arg6[%c0_24, %c0_25] : memref<128x128xf32, #tpu.memory_space<vmem>>, vector<128x128xf32>
      %cst_26 = arith.constant dense<0.000000e+00> : vector<2x128xf32>
      %40 = tpu.matmul %38, %39, %cst_26 {dimension_numbers = #tpu.dot_dimension_numbers<[1], [0], [0], [1], [0, 0, 1, 1], [], []>} : vector<2x128xf32>, vector<128x128xf32>, vector<2x128xf32> -> vector<2x128xf32>
      %c0_27 = arith.constant 0 : index
      %c0_28 = arith.constant 0 : index
      %41 = vector.load %arg7[%c0_27, %c0_28] : memref<1x128xf32, #tpu.memory_space<vmem>>, vector<1x128xf32>
      %42 = vector.broadcast %41 : vector<1x128xf32> to vector<2x128xf32>
      %43 = arith.addf %40, %42 : vector<2x128xf32>
      %cst_29 = arith.constant dense<0xFF800000> : vector<2xf32>
      %44 = vector.multi_reduction <maximumf>, %43, %cst_29 [1] : vector<2x128xf32> to vector<2xf32>
      %45 = vector.shape_cast %44 : vector<2xf32> to vector<2x1xf32>
      %46 = vector.broadcast %45 : vector<2x1xf32> to vector<2x128xf32>
      %47 = arith.subf %43, %46 : vector<2x128xf32>
      %48 = math.exp %47 : vector<2x128xf32>
      %cst_30 = arith.constant dense<0.000000e+00> : vector<2xf32>
      %49 = vector.multi_reduction <add>, %48, %cst_30 [1] : vector<2x128xf32> to vector<2xf32>
      %50 = vector.shape_cast %49 : vector<2xf32> to vector<2x1xf32>
      %51 = vector.broadcast %50 : vector<2x1xf32> to vector<2x128xf32>
      %52 = arith.divf %48, %51 : vector<2x128xf32>
      %c0_31 = arith.constant 0 : index
      %c0_32 = arith.constant 0 : index
      %53 = vector.load %arg8[%c0_31, %c0_32] : memref<2x128xf32, #tpu.memory_space<vmem>>, vector<2x128xf32>
      tpu.vector_store %arg8[%c0_31, %c0_32], %52 {strides = array<i32>} : memref<2x128xf32, #tpu.memory_space<vmem>>, vector<2x128xf32>,
    } else {
    }
    return
  }
  func.func @transform_0(%arg0: i32) -> (i32, i32) {
    %c0_i32 = arith.constant 0 : i32
    %c0_i32_0 = arith.constant 0 : i32
    %c0_i32_1 = arith.constant 0 : i32
    return %c0_i32, %c0_i32_0 : i32, i32
  }
  func.func @transform_1(%arg0: i32) -> (i32, i32) {
    %c0_i32 = arith.constant 0 : i32
    %c0_i32_0 = arith.constant 0 : i32
    %c0_i32_1 = arith.constant 0 : i32
    return %c0_i32, %c0_i32_0 : i32, i32
  }
  func.func @transform_2(%arg0: i32) -> (i32, i32) {
    %c0_i32 = arith.constant 0 : i32
    %c0_i32_0 = arith.constant 0 : i32
    %c0_i32_1 = arith.constant 0 : i32
    return %c0_i32, %c0_i32_0 : i32, i32
  }
  func.func @transform_3(%arg0: i32) -> (i32, i32, i32) {
    %c0_i32 = arith.constant 0 : i32
    %c0_i32_0 = arith.constant 0 : i32
    %c0_i32_1 = arith.constant 0 : i32
    return %arg0, %c0_i32, %c0_i32_0 : i32, i32, i32
  }
  func.func @transform_4(%arg0: i32) -> (i32, i32, i32) {
    %c0_i32 = arith.constant 0 : i32
    %c0_i32_0 = arith.constant 0 : i32
    %c0_i32_1 = arith.constant 0 : i32
    return %arg0, %c0_i32, %c0_i32_0 : i32, i32, i32
  }
  func.func @transform_5(%arg0: i32) -> (i32, i32) {
    %c0_i32 = arith.constant 0 : i32
    %c0_i32_0 = arith.constant 0 : i32
    %c0_i32_1 = arith.constant 0 : i32
    return %c0_i32, %c0_i32_0 : i32, i32
  }
  func.func @transform_6(%arg0: i32) -> (i32, i32) {
    %c0_i32 = arith.constant 0 : i32
    %c0_i32_0 = arith.constant 0 : i32
    %c0_i32_1 = arith.constant 0 : i32
    return %c0_i32, %c0_i32_0 : i32, i32
  }
  func.func @transform_7(%arg0: i32) -> (i32, i32) {
    %c0_i32 = arith.constant 0 : i32
    %c0_i32_0 = arith.constant 0 : i32
    %c0_i32_1 = arith.constant 0 : i32
    return %c0_i32, %c0_i32_0 : i32, i32
  }
}

</mosaic_0001>

<llo_original>
// kernel: tpu_custom_call.1
$region0: #{tpu_custom_call.1}
  #allocation0 [shape = 'u32[]', space=smem, size = 0x4, offset = 0x4, fixed_abs, tag = 'smem constant byte address 0x4 - core index']
  #allocation1 [shape = 'u32[144,128]{1,0:T(1,128)}', space=vmem, size = 0x12000, scoped, tag = 'internal scratch']
  #allocation2 [shape = 'f32[16,128]{1,0:T(8,128)}', space=vmem, size = 0x2000, scoped, tag = 'scratch operand']
  %s0 = inlined_call_operand.vmem [shape: f32[16,16], index: 0, kind: input, shape index: {}]
  %s1 = inlined_call_operand.hbm [shape: f32[16,128], index: 1, kind: input, shape index: {}]
  %s2 = inlined_call_operand.vmem [shape: f32[16,1], index: 2, kind: input, shape index: {}]
  %s3 = inlined_call_operand.hbm [shape: f32[2,128,128], index: 3, kind: input, shape index: {}]
  %s4 = inlined_call_operand.vmem [shape: f32[2,1,128], index: 4, kind: input, shape index: {}]
  %s5 = inlined_call_operand.hbm [shape: f32[128,128], index: 5, kind: input, shape index: {}]
  %s6 = inlined_call_operand.vmem [shape: f32[1,128], index: 6, kind: input, shape index: {}]
  %s7 = inlined_call_operand.hbm [shape: f32[2,128], index: 7, kind: output, shape index: {}]
  %s8 = sld [smem:[#allocation0]]
  $region81: #{tpu_custom_call.1} parent=0
    _
  %s10 = ssub.s32 1, %s8
  %s11 = scalar_select 0, %s10, %s8
  $region1: #{tpu_custom_call.1} parent=0
    #allocation3 [shape = 'u8[8192]{0}', space=vmem, size = 0x2000, scoped, tag = 'input window, operand 1, single buffered']
    #allocation4 [shape = 's32[2]{0}', space=sflag, size = 0x8, scoped, tag = 'scoped memory for tpu_custom_call.1']
    #allocation5 [shape = 's32[2]{0}', space=sflag, size = 0x8, scoped, tag = 'scoped memory for tpu_custom_call.1']
    #allocation6 [shape = 'u8[131072]{0}', space=vmem, size = 0x20000, scoped, tag = 'input window, operand 3']
    #allocation7 [shape = 's32[2]{0}', space=sflag, size = 0x8, scoped, tag = 'scoped memory for tpu_custom_call.1']
    #allocation8 [shape = 'u8[65536]{0}', space=vmem, size = 0x10000, scoped, tag = 'input window, operand 5, single buffered']
    #allocation9 [shape = 'u8[1024]{0}', space=vmem, size = 0x400, scoped, tag = 'output window, operand 0, single buffered']
    %12 = vsyncpa [#allocation4], 0
    %13 = vsyncpa [#allocation7], 0
    %s14 = scalar_lea.sflag [#allocation7], 1
    %15 = vsyncpa %s14, 0
    %16 = vsyncpa [#allocation5], 0
    loop: start=0, step=1, limit=4
    $region2: #{tpu_custom_call.1} parent=1 // loop_pre_header
      _
    $region3: #{tpu_custom_call.1} parent=1 // loop_header
      %s18 = sphi 0, %s22
      %p19 = scmp.ge.s32.totalorder %s18, 4
      %s26 = sphi 0, %s26
      %s28 = sphi 0, %s26
      %s29 = sphi 0, %s28
      %s43 = sphi 0, %s29
      %s47 = sphi 0, %s47
      %s49 = sphi 0, %s47
      %s50 = sphi 0, %s49
      %s64 = sphi 0, %s50
      %s68 = sphi 0, %s68
      %s70 = sphi 0, %s68
      %s71 = sphi 0, %s70
      %s85 = sphi 0, %s71
      %s91 = sphi 0, %s93
      %s94 = sphi 0, %s91
      %s95 = sphi 0, %s94
      %s111 = sphi 0, %s95
      %s117 = sphi 0, %s119
      %s120 = sphi 0, %s117
      %s121 = sphi 0, %s120
      %s137 = sphi 0, %s121
      %s141 = sphi 0, %s141
      %s143 = sphi 0, %s141
      %s144 = sphi 0, %s143
      %s158 = sphi 0, %s144
      %s162 = sphi 0, %s162
      %s164 = sphi 0, %s162
      %s165 = sphi 0, %s164
      %s179 = sphi 0, %s165
      %s183 = sphi 0, %s183
      %s185 = sphi 0, %s183
      %s186 = sphi 0, %s185
      %s200 = sphi 0, %s186
    $region4: #{tpu_custom_call.1} parent=1 // loop_header_branch
      %21 = sbr.rel (%p19) target = $region8
    $region5: #{tpu_custom_call.1} parent=1 // loop_body
      %s23 = ssub.s32 %s18, 1
      %s24 = ssub.s32 %s18, 2
      %s25 = sadd.s32 %s18, 1
      %s27 = sadd.s32 %s26, 1
      %p30 = scmp.eq.s32.totalorder %s18, 1
      %p31 = scmp.ne.s32.totalorder %s26, %s28
      %p32 = scmp.eq.s32.totalorder %s18, 0
      %p33 = por %p31, %p32
      %p34 = scmp.ne.s32.totalorder %s26, %s28
      %p35 = scmp.eq.s32.totalorder %s23, 1
      %p36 = por %p34, %p35
      %p37 = scmp.ne.s32.totalorder %s28, %s29
      %p38 = scmp.eq.s32.totalorder %s23, 0
      %p39 = por %p37, %p38
      %p40 = scmp.ne.s32.totalorder %s28, %s29
      %p41 = scmp.eq.s32.totalorder %s24, 1
      %p42 = por %p40, %p41
      %p44 = scmp.ne.s32.totalorder %s29, %s43
      %p45 = scmp.eq.s32.totalorder %s24, 0
      %p46 = por %p44, %p45
      %s48 = sadd.s32 %s47, 1
      %p51 = scmp.eq.s32.totalorder %s18, 1
      %p52 = scmp.ne.s32.totalorder %s47, %s49
      %p53 = scmp.eq.s32.totalorder %s18, 0
      %p54 = por %p52, %p53
      %p55 = scmp.ne.s32.totalorder %s47, %s49
      %p56 = scmp.eq.s32.totalorder %s23, 1
      %p57 = por %p55, %p56
      %p58 = scmp.ne.s32.totalorder %s49, %s50
      %p59 = scmp.eq.s32.totalorder %s23, 0
      %p60 = por %p58, %p59
      %p61 = scmp.ne.s32.totalorder %s49, %s50
      %p62 = scmp.eq.s32.totalorder %s24, 1
      %p63 = por %p61, %p62
      %p65 = scmp.ne.s32.totalorder %s50, %s64
      %p66 = scmp.eq.s32.totalorder %s24, 0
      %p67 = por %p65, %p66
      %s69 = sadd.s32 %s68, 1
      %p72 = scmp.eq.s32.totalorder %s18, 1
      %p73 = scmp.ne.s32.totalorder %s68, %s70
      %p74 = scmp.eq.s32.totalorder %s18, 0
      %p75 = por %p73, %p74
      %p76 = scmp.ne.s32.totalorder %s68, %s70
      %p77 = scmp.eq.s32.totalorder %s23, 1
      %p78 = por %p76, %p77
      %p79 = scmp.ne.s32.totalorder %s70, %s71
      %p80 = scmp.eq.s32.totalorder %s23, 0
      %p81 = por %p79, %p80
      %p82 = scmp.ne.s32.totalorder %s70, %s71
      %p83 = scmp.eq.s32.totalorder %s24, 1
      %p84 = por %p82, %p83
      %p86 = scmp.ne.s32.totalorder %s71, %s85
      %p87 = scmp.eq.s32.totalorder %s24, 0
      %p88 = por %p86, %p87
      %s89 = ssub.s32 %s18, %s25
      %p90 = scmp.eq.s32.totalorder %s89, 0
      %s92 = sadd.s32 %s91, 1
      %s93 = scalar_select %p90, %s91, %s92
      %p96 = pneg %p90
      %p97 = scmp.eq.s32.totalorder %s18, 1
      %p98 = por %p96, %p97
      %p99 = scmp.ne.s32.totalorder %s91, %s94
      %p100 = scmp.eq.s32.totalorder %s18, 0
      %p101 = por %p99, %p100
      %p102 = scmp.ne.s32.totalorder %s91, %s94
      %p103 = scmp.eq.s32.totalorder %s23, 1
      %p104 = por %p102, %p103
      %p105 = scmp.ne.s32.totalorder %s94, %s95
      %p106 = scmp.eq.s32.totalorder %s23, 0
      %p107 = por %p105, %p106
      %p108 = scmp.ne.s32.totalorder %s94, %s95
      %p109 = scmp.eq.s32.totalorder %s24, 1
      %p110 = por %p108, %p109
      %p112 = scmp.ne.s32.totalorder %s95, %s111
      %p113 = scmp.eq.s32.totalorder %s24, 0
      %p114 = por %p112, %p113
      %s115 = ssub.s32 %s18, %s25
      %p116 = scmp.eq.s32.totalorder %s115, 0
      %s118 = sadd.s32 %s117, 1
      %s119 = scalar_select %p116, %s117, %s118
      %p122 = pneg %p116
      %p123 = scmp.eq.s32.totalorder %s18, 1
      %p124 = por %p122, %p123
      %p125 = scmp.ne.s32.totalorder %s117, %s120
      %p126 = scmp.eq.s32.totalorder %s18, 0
      %p127 = por %p125, %p126
      %p128 = scmp.ne.s32.totalorder %s117, %s120
      %p129 = scmp.eq.s32.totalorder %s23, 1
      %p130 = por %p128, %p129
      %p131 = scmp.ne.s32.totalorder %s120, %s121
      %p132 = scmp.eq.s32.totalorder %s23, 0
      %p133 = por %p131, %p132
      %p134 = scmp.ne.s32.totalorder %s120, %s121
      %p135 = scmp.eq.s32.totalorder %s24, 1
      %p136 = por %p134, %p135
      %p138 = scmp.ne.s32.totalorder %s121, %s137
      %p139 = scmp.eq.s32.totalorder %s24, 0
      %p140 = por %p138, %p139
      %s142 = sadd.s32 %s141, 1
      %p145 = scmp.eq.s32.totalorder %s18, 1
      %p146 = scmp.ne.s32.totalorder %s141, %s143
      %p147 = scmp.eq.s32.totalorder %s18, 0
      %p148 = por %p146, %p147
      %p149 = scmp.ne.s32.totalorder %s141, %s143
      %p150 = scmp.eq.s32.totalorder %s23, 1
      %p151 = por %p149, %p150
      %p152 = scmp.ne.s32.totalorder %s143, %s144
      %p153 = scmp.eq.s32.totalorder %s23, 0
      %p154 = por %p152, %p153
      %p155 = scmp.ne.s32.totalorder %s143, %s144
      %p156 = scmp.eq.s32.totalorder %s24, 1
      %p157 = por %p155, %p156
      %p159 = scmp.ne.s32.totalorder %s144, %s158
      %p160 = scmp.eq.s32.totalorder %s24, 0
      %p161 = por %p159, %p160
      %s163 = sadd.s32 %s162, 1
      %p166 = scmp.eq.s32.totalorder %s18, 1
      %p167 = scmp.ne.s32.totalorder %s162, %s164
      %p168 = scmp.eq.s32.totalorder %s18, 0
      %p169 = por %p167, %p168
      %p170 = scmp.ne.s32.totalorder %s162, %s164
      %p171 = scmp.eq.s32.totalorder %s23, 1
      %p172 = por %p170, %p171
      %p173 = scmp.ne.s32.totalorder %s164, %s165
      %p174 = scmp.eq.s32.totalorder %s23, 0
      %p175 = por %p173, %p174
      %p176 = scmp.ne.s32.totalorder %s164, %s165
      %p177 = scmp.eq.s32.totalorder %s24, 1
      %p178 = por %p176, %p177
      %p180 = scmp.ne.s32.totalorder %s165, %s179
      %p181 = scmp.eq.s32.totalorder %s24, 0
      %p182 = por %p180, %p181
      %s184 = sadd.s32 %s183, 1
      %p187 = scmp.eq.s32.totalorder %s18, 1
      %p188 = scmp.ne.s32.totalorder %s183, %s185
      %p189 = scmp.eq.s32.totalorder %s18, 0
      %p190 = por %p188, %p189
      %p191 = scmp.ne.s32.totalorder %s183, %s185
      %p192 = scmp.eq.s32.totalorder %s23, 1
      %p193 = por %p191, %p192
      %p194 = scmp.ne.s32.totalorder %s185, %s186
      %p195 = scmp.eq.s32.totalorder %s23, 0
      %p196 = por %p194, %p195
      %p197 = scmp.ne.s32.totalorder %s185, %s186
      %p198 = scmp.eq.s32.totalorder %s24, 1
      %p199 = por %p197, %p198
      %p201 = scmp.ne.s32.totalorder %s186, %s200
      %p202 = scmp.eq.s32.totalorder %s24, 0
      %p203 = por %p201, %p202
      %p204 = scmp.le.s32.totalorder 1, %s18
      %p205 = scmp.lt.s32.totalorder %s18, 3
      %p206 = pnand %p204, %p205
      %p207 = pneg %p206
      // Predicated region
      $region9: #{tpu_custom_call.1} parent=5 // pred_check
        _
      $region10: #{tpu_custom_call.1} parent=5 // pred_check_branch
        %209 = sbr.rel (%p206) target = $region12
      $region11: #{tpu_custom_call.1} parent=5 // pred_region
        %s210 = ssub.s32 %s18, 1
        // Predicated region
        $region13: #{tpu_custom_call.1} parent=11 // pred_check
          %p211 = pneg %p39
        $region14: #{tpu_custom_call.1} parent=11 // pred_check_branch
          %213 = sbr.rel (%p211) target = $region16
        $region15: #{tpu_custom_call.1} parent=11 // pred_region
          _
        $region16: #{tpu_custom_call.1} parent=11 // pred_fallthru
          _
        // Predicated region
        $region17: #{tpu_custom_call.1} parent=11 // pred_check
          %p214 = pneg %p60
        $region18: #{tpu_custom_call.1} parent=11 // pred_check_branch
          %216 = sbr.rel (%p214) target = $region20
        $region19: #{tpu_custom_call.1} parent=11 // pred_region
          %s218 = ssub.s32 256, 256
          %219 = vsyncadd [#allocation4], %s218
          %s220 = sshll.u32 [#allocation3], 4
          %s221 = int_to_ptr.vmem [resolvable:$true] %s220
          %226 = dma.hbm_to_vmem [thread:$0]  %s1, 256, %s221, [#allocation4], 128, 128, 8
        $region20: #{tpu_custom_call.1} parent=11 // pred_fallthru
          _
        // Predicated region
        $region21: #{tpu_custom_call.1} parent=11 // pred_check
          %p227 = pneg %p81
        $region22: #{tpu_custom_call.1} parent=11 // pred_check_branch
          %229 = sbr.rel (%p227) target = $region24
        $region23: #{tpu_custom_call.1} parent=11 // pred_region
          _
        $region24: #{tpu_custom_call.1} parent=11 // pred_fallthru
          _
        // Predicated region
        $region25: #{tpu_custom_call.1} parent=11 // pred_check
          %p230 = pneg %p154
        $region26: #{tpu_custom_call.1} parent=11 // pred_check_branch
          %232 = sbr.rel (%p230) target = $region28
        $region27: #{tpu_custom_call.1} parent=11 // pred_region
          %s234 = ssub.s32 2048, 2048
          %235 = vsyncadd [#allocation7], %s234
          %s236 = sshll.u32 [#allocation8], 4
          %s237 = int_to_ptr.vmem [resolvable:$true] %s236
          %242 = dma.hbm_to_vmem [thread:$0]  %s5, 2048, %s237, [#allocation7], 128, 128, 8
        $region28: #{tpu_custom_call.1} parent=11 // pred_fallthru
          _
        // Predicated region
        $region29: #{tpu_custom_call.1} parent=11 // pred_check
          %p243 = pneg %p175
        $region30: #{tpu_custom_call.1} parent=11 // pred_check_branch
          %245 = sbr.rel (%p243) target = $region32
        $region31: #{tpu_custom_call.1} parent=11 // pred_region
          _
        $region32: #{tpu_custom_call.1} parent=11 // pred_fallthru
          _
      $region12: #{tpu_custom_call.1} parent=5 // pred_fallthru
        _
      %p246 = scmp.lt.s32.totalorder %s18, 2
      // Predicated region
      $region33: #{tpu_custom_call.1} parent=5 // pred_check
        %p247 = pneg %p246
      $region34: #{tpu_custom_call.1} parent=5 // pred_check_branch
        %249 = sbr.rel (%p247) target = $region36
      $region35: #{tpu_custom_call.1} parent=5 // pred_region
        // Predicated region
        $region37: #{tpu_custom_call.1} parent=35 // pred_check
          %p250 = pneg %p101
        $region38: #{tpu_custom_call.1} parent=35 // pred_check_branch
          %252 = sbr.rel (%p250) target = $region40
        $region39: #{tpu_custom_call.1} parent=35 // pred_region
          %s253 = sand.u32 %s18, 1
          %s254 = scalar_lea.sflag [#allocation7], %s253
          %s255 = sand.u32 %s91, 1
          %s256 = smul.addr %s255, 128
          %s257 = scalar_lea.vmem [#allocation6], %s256
          %s259 = ssub.s32 2048, 2048
          %260 = vsyncadd %s254, %s259
          %s261 = smul.addr %s18, 16
          %s262 = smul.addr %s261, 128
          %s263 = scalar_lea.hbm %s3, %s262
          %s264 = sshll.u32 %s257, 4
          %s265 = int_to_ptr.vmem [resolvable:$true] %s264
          %270 = dma.hbm_to_vmem [thread:$0]  %s263, 2048, %s265, %s254, 128, 128, 8
        $region40: #{tpu_custom_call.1} parent=35 // pred_fallthru
          _
        // Predicated region
        $region41: #{tpu_custom_call.1} parent=35 // pred_check
          %p271 = pneg %p127
        $region42: #{tpu_custom_call.1} parent=35 // pred_check_branch
          %273 = sbr.rel (%p271) target = $region44
        $region43: #{tpu_custom_call.1} parent=35 // pred_region
          %p274 = scmp.lt.s32.totalorder %s18, 1
          %s275 = scalar_select %p274, %s18, 1
          %s276 = scalar_lea.vmem %s4, %s275
        $region44: #{tpu_custom_call.1} parent=35 // pred_fallthru
          _
      $region36: #{tpu_custom_call.1} parent=5 // pred_fallthru
        _
      %p277 = scmp.le.s32.totalorder 1, %s18
      %p278 = scmp.lt.s32.totalorder %s18, 3
      %p279 = pnand %p277, %p278
      %p280 = pneg %p279
      // Predicated region
      $region45: #{tpu_custom_call.1} parent=5 // pred_check
        _
      $region46: #{tpu_custom_call.1} parent=5 // pred_check_branch
        %282 = sbr.rel (%p279) target = $region48
      $region47: #{tpu_custom_call.1} parent=5 // pred_region
        %s283 = ssub.s32 %s18, 1
        // Predicated region
        $region49: #{tpu_custom_call.1} parent=47 // pred_check
          %p284 = pneg %p60
        $region50: #{tpu_custom_call.1} parent=47 // pred_check_branch
          %286 = sbr.rel (%p284) target = $region52
        $region51: #{tpu_custom_call.1} parent=47 // pred_region
          %287 = dma.done [#allocation4], 256
        $region52: #{tpu_custom_call.1} parent=47 // pred_fallthru
          _
        %s288 = sand.u32 %s23, 1
        %s289 = scalar_lea.sflag [#allocation7], %s288
        %s290 = sand.u32 %s94, 1
        %s291 = smul.addr %s290, 128
        %s292 = scalar_lea.vmem [#allocation6], %s291
        // Predicated region
        $region53: #{tpu_custom_call.1} parent=47 // pred_check
          %p293 = pneg %p107
        $region54: #{tpu_custom_call.1} parent=47 // pred_check_branch
          %295 = sbr.rel (%p293) target = $region56
        $region55: #{tpu_custom_call.1} parent=47 // pred_region
          %296 = dma.done %s289, 2048
        $region56: #{tpu_custom_call.1} parent=47 // pred_fallthru
          _
        // Predicated region
        $region57: #{tpu_custom_call.1} parent=47 // pred_check
          %p297 = pneg %p154
        $region58: #{tpu_custom_call.1} parent=47 // pred_check_branch
          %299 = sbr.rel (%p297) target = $region60
        $region59: #{tpu_custom_call.1} parent=47 // pred_region
          %300 = dma.done [#allocation7], 2048
        $region60: #{tpu_custom_call.1} parent=47 // pred_fallthru
          _
        %p301 = pneg %p39
        %p302 = pneg %p36
        %p303 = pneg %p60
        %p304 = pneg %p57
        %p305 = pneg %p81
        %p306 = pneg %p78
        %s307 = sand.u32 %s23, 1
        %s308 = scalar_lea.sflag [#allocation7], %s307
        %s309 = sand.u32 %s94, 1
        %s310 = smul.addr %s309, 128
        %s311 = scalar_lea.vmem [#allocation6], %s310
        %p312 = pneg %p107
        %p313 = pneg %p104
        %p314 = scmp.lt.s32.totalorder %s23, 1
        %s315 = scalar_select %p314, %s23, 1
        %s316 = scalar_lea.vmem %s4, %s315
        %p317 = pneg %p133
        %p318 = pneg %p130
        %p319 = pneg %p154
        %p320 = pneg %p151
        %p321 = pneg %p175
        %p322 = pneg %p172
        %p323 = pneg %p196
        %p324 = pneg %p193
        %p325 = scmp.lt.s32.totalorder %s23, 1
        %s326 = scalar_select %p325, %s23, 1
        %s327 = scalar_lea.vmem %s4, %s326
        %p328 = scmp.eq.s32.totalorder %s23, 0
        // Predicated region
        $region61: #{tpu_custom_call.1} parent=47 // pred_check
          %p329 = pneg %p328
        $region62: #{tpu_custom_call.1} parent=47 // pred_check_branch
          %331 = sbr.rel (%p329) target = $region64
        $region63: #{tpu_custom_call.1} parent=47 // pred_region
          %v332 = vld [vmem:[#allocation3] sm:$0xff]
          %v333 = vld [vmem:[#allocation3 + $0x8] sm:$0xff]
          %334 = vst [vmem:[#allocation2] sm:$0xff] %v332
          %335 = vst [vmem:[#allocation2 + $0x8] sm:$0xff] %v333
        $region64: #{tpu_custom_call.1} parent=47 // pred_fallthru
          _
        %v336 = vld [vmem:[#allocation2] sm:$0xff]
        %v337 = vld [vmem:[#allocation2 + $0x8] sm:$0xff]
        %v338 = vld [vmem:[%s292] sm:$0xff]
        %v339 = vld [vmem:[%s292 + $0x8] sm:$0xff]
        %v340 = vld [vmem:[%s292 + $0x10] sm:$0xff]
        %v341 = vld [vmem:[%s292 + $0x18] sm:$0xff]
        %v342 = vld [vmem:[%s292 + $0x20] sm:$0xff]
        %v343 = vld [vmem:[%s292 + $0x28] sm:$0xff]
        %v344 = vld [vmem:[%s292 + $0x30] sm:$0xff]
        %v345 = vld [vmem:[%s292 + $0x38] sm:$0xff]
        %v346 = vld [vmem:[%s292 + $0x40] sm:$0xff]
        %v347 = vld [vmem:[%s292 + $0x48] sm:$0xff]
        %v348 = vld [vmem:[%s292 + $0x50] sm:$0xff]
        %v349 = vld [vmem:[%s292 + $0x58] sm:$0xff]
        %v350 = vld [vmem:[%s292 + $0x60] sm:$0xff]
        %v351 = vld [vmem:[%s292 + $0x68] sm:$0xff]
        %v352 = vld [vmem:[%s292 + $0x70] sm:$0xff]
        %v353 = vld [vmem:[%s292 + $0x78] sm:$0xff]
        %354 = vmatprep.subr.mxu0 0.0
        %355 = vmatpush1.msra.mxu0 %v353
        %356 = vmatprep.subr.mxu0 0.0
        %357 = vmatpush1.msra.mxu0 %v352
        %358 = vmatprep.subr.mxu0 0.0
        %359 = vmatpush1.msra.mxu0 %v351
        %360 = vmatprep.subr.mxu0 0.0
        %361 = vmatpush1.msra.mxu0 %v350
        %362 = vmatprep.subr.mxu0 0.0
        %363 = vmatpush1.msra.mxu0 %v349
        %364 = vmatprep.subr.mxu0 0.0
        %365 = vmatpush1.msra.mxu0 %v348
        %366 = vmatprep.subr.mxu0 0.0
        %367 = vmatpush1.msra.mxu0 %v347
        %368 = vmatprep.subr.mxu0 0.0
        %369 = vmatpush1.msra.mxu0 %v346
        %370 = vmatprep.subr.mxu0 0.0
        %371 = vmatpush1.msra.mxu0 %v345
        %372 = vmatprep.subr.mxu0 0.0
        %373 = vmatpush1.msra.mxu0 %v344
        %374 = vmatprep.subr.mxu0 0.0
        %375 = vmatpush1.msra.mxu0 %v343
        %376 = vmatprep.subr.mxu0 0.0
        %377 = vmatpush1.msra.mxu0 %v342
        %378 = vmatprep.subr.mxu0 0.0
        %379 = vmatpush1.msra.mxu0 %v341
        %380 = vmatprep.subr.mxu0 0.0
        %381 = vmatpush1.msra.mxu0 %v340
        %382 = vmatprep.subr.mxu0 0.0
        %383 = vmatpush1.msra.mxu0 %v339
        %384 = vmatprep.subr.mxu0 0.0
        %385 = vmatpush1.msra.mxu0 %v338
        %386 = vmatprep.subr.mxu0 0.0
        %387 = vmatpush2.msra.mxu0 0.0
        %388 = vmatprep.subr.mxu0 0.0
        %389 = vmatpush2.msra.mxu0 0.0
        %390 = vmatprep.subr.mxu0 0.0
        %391 = vmatpush2.msra.mxu0 0.0
        %392 = vmatprep.subr.mxu0 0.0
        %393 = vmatpush2.msra.mxu0 0.0
        %394 = vmatprep.subr.mxu0 0.0
        %395 = vmatpush2.msra.mxu0 0.0
        %396 = vmatprep.subr.mxu0 0.0
        %397 = vmatpush2.msra.mxu0 0.0
        %398 = vmatprep.subr.mxu0 0.0
        %399 = vmatpush2.msra.mxu0 0.0
        %400 = vmatprep.subr.mxu0 0.0
        %401 = vmatpush2.msra.mxu0 0.0
        %402 = vmatprep.subr.mxu0 0.0
        %403 = vmatpush2.msra.mxu0 0.0
        %404 = vmatprep.subr.mxu0 0.0
        %405 = vmatpush2.msra.mxu0 0.0
        %406 = vmatprep.subr.mxu0 0.0
        %407 = vmatpush2.msra.mxu0 0.0
        %408 = vmatprep.subr.mxu0 0.0
        %409 = vmatpush2.msra.mxu0 0.0
        %410 = vmatprep.subr.mxu0 0.0
        %411 = vmatpush2.msra.mxu0 0.0
        %412 = vmatprep.subr.mxu0 0.0
        %413 = vmatpush2.msra.mxu0 0.0
        %414 = vmatprep.subr.mxu0 0.0
        %415 = vmatpush2.msra.mxu0 0.0
        %416 = vmatprep.subr.mxu0 0.0
        %417 = vmatpush2.msra.mxu0 0.0
        %418 = vmatprep.mubr.f32.mxu0 0.0
        %419 = vmatmul.mubr.f32.gmra.mxu0 %v336
        %v420 = vpop.f32.mrf.mxu0
        %v421 = vadd.f32 0.0, %v420
        %v422 = vpop.f32.mrf.mxu0
        %423 = vmatprep.mubr.f32.mxu0 0.0
        %424 = vmatmul.mubr.f32.gmra.mxu0 %v337
        %v425 = vpop.f32.mrf.mxu0
        %v426 = vadd.f32 0.0, %v425
        %v427 = vpop.f32.mrf.mxu0
        %428 = vdwg.mxu0
        %v429 = vld [vmem:[%s0] sm:$0xff]
        %v430 = vld [vmem:[%s0 + $0x8] sm:$0xff]
        %v431 = vld [vmem:[%s327] sm:$0x1]
        %v433 = vlaneseq
        %v434 = vshrl.u32 %v433, 7
        %v435 = vsub.s32 0, %v434
        %v436 = vrot.slane %v431, %v435
        %vm438 = vcmask 130048
        %v440 = vsel %vm438, %v429, 0
        %v443 = vsel %vm438, %v430, 0
        %445 = vmatprep.subr.mxu0 0.0
        %446 = vmatpush1.msra.mxu0 0.0
        %447 = vmatprep.subr.mxu0 0.0
        %448 = vmatpush1.msra.mxu0 0.0
        %449 = vmatprep.subr.mxu0 0.0
        %450 = vmatpush1.msra.mxu0 0.0
        %451 = vmatprep.subr.mxu0 0.0
        %452 = vmatpush1.msra.mxu0 0.0
        %453 = vmatprep.subr.mxu0 0.0
        %454 = vmatpush1.msra.mxu0 0.0
        %455 = vmatprep.subr.mxu0 0.0
        %456 = vmatpush1.msra.mxu0 0.0
        %457 = vmatprep.subr.mxu0 0.0
        %458 = vmatpush1.msra.mxu0 0.0
        %459 = vmatprep.subr.mxu0 0.0
        %460 = vmatpush1.msra.mxu0 0.0
        %461 = vmatprep.subr.mxu0 0.0
        %462 = vmatpush1.msra.mxu0 0.0
        %463 = vmatprep.subr.mxu0 0.0
        %464 = vmatpush1.msra.mxu0 0.0
        %465 = vmatprep.subr.mxu0 0.0
        %466 = vmatpush1.msra.mxu0 0.0
        %467 = vmatprep.subr.mxu0 0.0
        %468 = vmatpush1.msra.mxu0 0.0
        %469 = vmatprep.subr.mxu0 0.0
        %470 = vmatpush1.msra.mxu0 0.0
        %471 = vmatprep.subr.mxu0 0.0
        %472 = vmatpush1.msra.mxu0 0.0
        %473 = vmatprep.subr.mxu0 0.0
        %474 = vmatpush1.msra.mxu0 %v426
        %475 = vmatprep.subr.mxu0 0.0
        %476 = vmatpush1.msra.mxu0 %v421
        %477 = vmatprep.subr.mxu0 0.0
        %478 = vmatpush2.msra.mxu0 0.0
        %479 = vmatprep.subr.mxu0 0.0
        %480 = vmatpush2.msra.mxu0 0.0
        %481 = vmatprep.subr.mxu0 0.0
        %482 = vmatpush2.msra.mxu0 0.0
        %483 = vmatprep.subr.mxu0 0.0
        %484 = vmatpush2.msra.mxu0 0.0
        %485 = vmatprep.subr.mxu0 0.0
        %486 = vmatpush2.msra.mxu0 0.0
        %487 = vmatprep.subr.mxu0 0.0
        %488 = vmatpush2.msra.mxu0 0.0
        %489 = vmatprep.subr.mxu0 0.0
        %490 = vmatpush2.msra.mxu0 0.0
        %491 = vmatprep.subr.mxu0 0.0
        %492 = vmatpush2.msra.mxu0 0.0
        %493 = vmatprep.subr.mxu0 0.0
        %494 = vmatpush2.msra.mxu0 0.0
        %495 = vmatprep.subr.mxu0 0.0
        %496 = vmatpush2.msra.mxu0 0.0
        %497 = vmatprep.subr.mxu0 0.0
        %498 = vmatpush2.msra.mxu0 0.0
        %499 = vmatprep.subr.mxu0 0.0
        %500 = vmatpush2.msra.mxu0 0.0
        %501 = vmatprep.subr.mxu0 0.0
        %502 = vmatpush2.msra.mxu0 0.0
        %503 = vmatprep.subr.mxu0 0.0
        %504 = vmatpush2.msra.mxu0 0.0
        %505 = vmatprep.subr.mxu0 0.0
        %506 = vmatpush2.msra.mxu0 0.0
        %507 = vmatprep.subr.mxu0 0.0
        %508 = vmatpush2.msra.mxu0 0.0
        %509 = vmatprep.mubr.f32.mxu0 0.0
        %510 = vmatmul.mubr.f32.gmra.mxu0 %v440
        %v511 = vpop.f32.mrf.mxu0
        %v512 = vadd.f32 %v436, %v511
        %v513 = vpop.f32.mrf.mxu0
        %514 = vmatprep.mubr.f32.mxu0 0.0
        %515 = vmatmul.mubr.f32.gmra.mxu0 %v443
        %v516 = vpop.f32.mrf.mxu0
        %v517 = vadd.f32 %v436, %v516
        %v518 = vpop.f32.mrf.mxu0
        %519 = vdwg.mxu0
        %vm520 = vcmp.gt.f32.partialorder %v512, 0.0
        %vm521 = vcmp.gt.f32.partialorder %v517, 0.0
        %v522 = vmul.f32 %v512, 1.442695
        %v523 = vpow.pop %v522
        %v524 = vmul.f32 %v517, 1.442695
        %v525 = vpow.pop %v524
        %v526 = vsub.f32 %v523, 1.0
        %v527 = vsub.f32 %v525, 1.0
        %v528 = vsel %vm520, %v512, %v526
        %v529 = vsel %vm521, %v517, %v527
        %530 = vst [vmem:[#allocation2] sm:$0xff] %v528
        %531 = vst [vmem:[#allocation2 + $0x8] sm:$0xff] %v529
        %p532 = scmp.eq.s32.totalorder %s23, 1
        // Predicated region
        $region65: #{tpu_custom_call.1} parent=47 // pred_check
          %p533 = pneg %p532
        $region66: #{tpu_custom_call.1} parent=47 // pred_check_branch
          %535 = sbr.rel (%p533) target = $region68
        $region67: #{tpu_custom_call.1} parent=47 // pred_region
          %v536 = vld [vmem:[%s2] sm:$0xff]
          %v537 = vld [vmem:[%s2 + $0x8] sm:$0xff]
          %539 = vset.pattern.permute.xlu0 0
          %540 = vperm.xlu0 %539, %v536
          %v541 = vpop.permute.xlu0 %540
          %544 = vset.pattern.permute.xlu0 0
          %545 = vperm.xlu0 %544, %v537
          %v546 = vpop.permute.xlu0 %545
          %vm548 = vcmp.eq.f32.partialorder %v541, 0.0
          %vm549 = vcmp.eq.f32.partialorder %v546, 0.0
          %v550 = vsel %vm548, %v528, -1e+30
          %v551 = vsel %vm549, %v529, -1e+30
          %v552 = vmax.f32 %v550, %v551
          %v553 = vrot.slane %v552, 4
          %v554 = vmax.f32 %v552, %v553
          %v555 = vrot.slane %v554, 2
          %v556 = vmax.f32 %v554, %v555
          %v557 = vrot.slane %v556, 1
          %v558 = vmax.f32 %v556, %v557
          %vm559 = vcmp.eq.f32.partialorder %v541, 1.0
          %vm560 = vcmp.eq.f32.partialorder %v546, 1.0
          %v561 = vsel %vm559, %v528, -1e+30
          %v562 = vsel %vm560, %v529, -1e+30
          %v563 = vmax.f32 %v561, %v562
          %v564 = vrot.slane %v563, 4
          %v565 = vmax.f32 %v563, %v564
          %v566 = vrot.slane %v565, 2
          %v567 = vmax.f32 %v565, %v566
          %v568 = vrot.slane %v567, 1
          %v569 = vmax.f32 %v567, %v568
          %vm570 = vcmask 1040384
          %v571 = vsel %vm570, %v558, %v569
          %v572 = vld [vmem:[#allocation8] sm:$0xff]
          %v573 = vld [vmem:[#allocation8 + $0x8] sm:$0xff]
          %v574 = vld [vmem:[#allocation8 + $0x10] sm:$0xff]
          %v575 = vld [vmem:[#allocation8 + $0x18] sm:$0xff]
          %v576 = vld [vmem:[#allocation8 + $0x20] sm:$0xff]
          %v577 = vld [vmem:[#allocation8 + $0x28] sm:$0xff]
          %v578 = vld [vmem:[#allocation8 + $0x30] sm:$0xff]
          %v579 = vld [vmem:[#allocation8 + $0x38] sm:$0xff]
          %v580 = vld [vmem:[#allocation8 + $0x40] sm:$0xff]
          %v581 = vld [vmem:[#allocation8 + $0x48] sm:$0xff]
          %v582 = vld [vmem:[#allocation8 + $0x50] sm:$0xff]
          %v583 = vld [vmem:[#allocation8 + $0x58] sm:$0xff]
          %v584 = vld [vmem:[#allocation8 + $0x60] sm:$0xff]
          %v585 = vld [vmem:[#allocation8 + $0x68] sm:$0xff]
          %v586 = vld [vmem:[#allocation8 + $0x70] sm:$0xff]
          %v587 = vld [vmem:[#allocation8 + $0x78] sm:$0xff]
          %v588 = vld [vmem:[%s6] sm:$0x1]
          %v590 = vlaneseq
          %v591 = vshrl.u32 %v590, 7
          %v592 = vsub.s32 0, %v591
          %v593 = vrot.slane %v588, %v592
          %595 = vmatprep.subr.mxu0 0.0
          %596 = vmatpush1.msra.mxu0 %v587
          %597 = vmatprep.subr.mxu0 0.0
          %598 = vmatpush1.msra.mxu0 %v586
          %599 = vmatprep.subr.mxu0 0.0
          %600 = vmatpush1.msra.mxu0 %v585
          %601 = vmatprep.subr.mxu0 0.0
          %602 = vmatpush1.msra.mxu0 %v584
          %603 = vmatprep.subr.mxu0 0.0
          %604 = vmatpush1.msra.mxu0 %v583
          %605 = vmatprep.subr.mxu0 0.0
          %606 = vmatpush1.msra.mxu0 %v582
          %607 = vmatprep.subr.mxu0 0.0
          %608 = vmatpush1.msra.mxu0 %v581
          %609 = vmatprep.subr.mxu0 0.0
          %610 = vmatpush1.msra.mxu0 %v580
          %611 = vmatprep.subr.mxu0 0.0
          %612 = vmatpush1.msra.mxu0 %v579
          %613 = vmatprep.subr.mxu0 0.0
          %614 = vmatpush1.msra.mxu0 %v578
          %615 = vmatprep.subr.mxu0 0.0
          %616 = vmatpush1.msra.mxu0 %v577
          %617 = vmatprep.subr.mxu0 0.0
          %618 = vmatpush1.msra.mxu0 %v576
          %619 = vmatprep.subr.mxu0 0.0
          %620 = vmatpush1.msra.mxu0 %v575
          %621 = vmatprep.subr.mxu0 0.0
          %622 = vmatpush1.msra.mxu0 %v574
          %623 = vmatprep.subr.mxu0 0.0
          %624 = vmatpush1.msra.mxu0 %v573
          %625 = vmatprep.subr.mxu0 0.0
          %626 = vmatpush1.msra.mxu0 %v572
          %627 = vmatprep.subr.mxu0 0.0
          %628 = vmatpush2.msra.mxu0 0.0
          %629 = vmatprep.subr.mxu0 0.0
          %630 = vmatpush2.msra.mxu0 0.0
          %631 = vmatprep.subr.mxu0 0.0
          %632 = vmatpush2.msra.mxu0 0.0
          %633 = vmatprep.subr.mxu0 0.0
          %634 = vmatpush2.msra.mxu0 0.0
          %635 = vmatprep.subr.mxu0 0.0
          %636 = vmatpush2.msra.mxu0 0.0
          %637 = vmatprep.subr.mxu0 0.0
          %638 = vmatpush2.msra.mxu0 0.0
          %639 = vmatprep.subr.mxu0 0.0
          %640 = vmatpush2.msra.mxu0 0.0
          %641 = vmatprep.subr.mxu0 0.0
          %642 = vmatpush2.msra.mxu0 0.0
          %643 = vmatprep.subr.mxu0 0.0
          %644 = vmatpush2.msra.mxu0 0.0
          %645 = vmatprep.subr.mxu0 0.0
          %646 = vmatpush2.msra.mxu0 0.0
          %647 = vmatprep.subr.mxu0 0.0
          %648 = vmatpush2.msra.mxu0 0.0
          %649 = vmatprep.subr.mxu0 0.0
          %650 = vmatpush2.msra.mxu0 0.0
          %651 = vmatprep.subr.mxu0 0.0
          %652 = vmatpush2.msra.mxu0 0.0
          %653 = vmatprep.subr.mxu0 0.0
          %654 = vmatpush2.msra.mxu0 0.0
          %655 = vmatprep.subr.mxu0 0.0
          %656 = vmatpush2.msra.mxu0 0.0
          %657 = vmatprep.subr.mxu0 0.0
          %658 = vmatpush2.msra.mxu0 0.0
          %659 = vmatprep.mubr.f32.mxu0 0.0
          %660 = vmatmul.mubr.f32.gmra.mxu0 %v571
          %v661 = vpop.f32.mrf.mxu0
          %v662 = vadd.f32 %v593, %v661
          %v663 = vpop.f32.mrf.mxu0
          %664 = vdwg.mxu0
          %vm665 = vcmask 1041408
          %v666 = vsel %vm665, %v662, -inf
          %667 = vmax.xlane.f32.xlu0 %v666
          %v668 = vpop.xlane.xlu0 %667
          %v669 = vsub.f32 %v662, %v668
          %v670 = vmul.f32 %v669, 1.442695
          %v671 = vpow.pop %v670
          %v672 = vsel %vm665, %v671, 0.0
          %673 = vadd.xlane.f32.xlu0 %v672
          %v674 = vpop.xlane.xlu0 %673
          %v675 = vrcp.pop %v674
          %v676 = vmul.f32 %v671, %v675
          %677 = vst [vmem:[#allocation9] sm:$0x3] %v676
        $region68: #{tpu_custom_call.1} parent=47 // pred_fallthru
          _
        // Predicated region
        $region69: #{tpu_custom_call.1} parent=47 // pred_check
          %p678 = pneg %p193
        $region70: #{tpu_custom_call.1} parent=47 // pred_check_branch
          %680 = sbr.rel (%p678) target = $region72
        $region71: #{tpu_custom_call.1} parent=47 // pred_region
          %s682 = ssub.s32 32, 32
          %683 = vsyncadd [#allocation5], %s682
          %s685 = sshll.u32 [#allocation9], 4
          %s686 = int_to_ptr.vmem [resolvable:$true] %s685
          %688 = dma.vmem_to_hbm [thread:$0]  %s686, 32, %s7, [#allocation5]
        $region72: #{tpu_custom_call.1} parent=47 // pred_fallthru
          _
        // Predicated region
        $region73: #{tpu_custom_call.1} parent=47 // pred_check
          %p689 = pneg %p193
        $region74: #{tpu_custom_call.1} parent=47 // pred_check_branch
          %691 = sbr.rel (%p689) target = $region76
        $region75: #{tpu_custom_call.1} parent=47 // pred_region
          %692 = dma.done [#allocation5], 32
        $region76: #{tpu_custom_call.1} parent=47 // pred_fallthru
          _
      $region48: #{tpu_custom_call.1} parent=5 // pred_fallthru
        _
      %p693 = scmp.le.s32.totalorder 2, %s18
      // Predicated region
      $region77: #{tpu_custom_call.1} parent=5 // pred_check
        %p694 = pneg %p693
      $region78: #{tpu_custom_call.1} parent=5 // pred_check_branch
        %696 = sbr.rel (%p694) target = $region80
      $region79: #{tpu_custom_call.1} parent=5 // pred_region
        %s697 = ssub.s32 %s18, 2
      $region80: #{tpu_custom_call.1} parent=5 // pred_fallthru
        _
    $region6: #{tpu_custom_call.1} parent=1 // loop_footer
      %s22 = sadd.s32 1, %s18
    $region7: #{tpu_custom_call.1} parent=1 // loop_footer_branch
      %17 = sbr.rel target = $region3
    $region8: #{tpu_custom_call.1} parent=1 // loop_exit
      _
    %698 = vsyncpa [#allocation4], 1
    %s699 = scalar_lea.sflag [#allocation4], 1
    %700 = vsyncpa %s699, 1
    %701 = vsyncpa [#allocation7], 1
    %s702 = scalar_lea.sflag [#allocation7], 1
    %703 = vsyncpa %s702, 1
    %704 = vsyncpa [#allocation5], 1
    %s705 = scalar_lea.sflag [#allocation5], 1
    %706 = vsyncpa %s705, 1

</llo_original>
